<compile_context>
chip_gen: v7x
topology: tpu7x:2x2x1
jax: 0.10.0
libtpu: 0.0.40
codegen_flags: <defaults>
</compile_context>

<pallas_src>
import functools
from functools import partial

import jax
import jax.numpy as jnp
from jax.experimental import pallas as pl
from jax.experimental.pallas import tpu as pltpu


def transition_down_kernel(x_ref, scale_ref, shift_ref, wT_ref, o_ref):
    # x_ref:     (T, C)   bf16      -- one of the 4 pool-window positions (grid axis 1)
    # scale_ref: (1, C)   f32/bf16  -- fused BN scale = gamma / sqrt(var + eps)
    # shift_ref: (1, C)   f32/bf16  -- fused BN shift = beta - mean * scale
    # wT_ref:    (C, Cp)  bf16      -- 1x1 conv weight transposed, output dim padded to Cp
    # o_ref:     (T, Cp)  f32       -- pooled rows; VMEM-resident across the pool axis (k)
    k = pl.program_id(1)

    # BatchNorm (eval, fused affine) + ReLU.  Compute dtype follows scale/shift dtype
    # (bf16 on v6e/v7x which have a bf16 VPU, f32 on v5e and older).
    s = scale_ref[...]
    a = x_ref[...].astype(s.dtype) * s + shift_ref[...]
    a = jnp.maximum(a, 0.0)

    # 1x1 conv == matmul: bf16 operands into the MXU, f32 accumulation.
    y = jnp.dot(a.astype(jnp.bfloat16), wT_ref[...],
                preferred_element_type=jnp.float32)

    # MaxPool2d(2, 2): running max straight into the resident output block.
    @pl.when(k == 0)
    def _():
        o_ref[...] = y

    @pl.when(k > 0)
    def _():
        o_ref[...] = jnp.maximum(o_ref[...], y)


@functools.lru_cache(maxsize=None)
def _tpu_config():
    """(vmem_capacity_bytes, bf16_valu) queried once, with conservative fallbacks."""
    try:
        vmem_cap = int(pltpu.get_tpu_info().vmem_capacity_bytes)
    except Exception:
        vmem_cap = 64 << 20                       # safe for v7x; fine elsewhere
    try:
        kind = jax.devices()[0].device_kind.lower()
    except Exception:
        kind = ""
    old_gen = any(t in kind for t in ("v2", "v3", "v4", "v5"))
    return vmem_cap, not old_gen                  # bf16 VPU on v6e / v7x


def _plan(M, C, Cp):
    """Pick row tile T, padded rows Mp, a VMEM limit and the affine dtype (static shapes)."""
    vmem_cap, bf16_affine = _tpu_config()
    budget = max(32 << 20, min(vmem_cap - (24 << 20), 100 << 20))
    per_row = 2 * C * 2 + 2 * Cp * 4              # x (bf16, 2 bufs) + out (f32, 2 bufs)
    fixed = 2 * C * Cp * 2 + 4 * 2 * C * 4        # wT (2 bufs) + scale/shift
    t_vmem = max(8, (int(budget * 0.85) - fixed) // per_row)
    t_target = max(512, (1 << 20) // max(2 * C, 1))   # aim for >= ~1 MiB bf16 x-block
    T = min(t_vmem, t_target)
    T = (T // 512) * 512 if T >= 512 else max(8, (T // 8) * 8)
    if M <= T:
        # Small problem: keep at least two row tiles so the "parallel" axis can be
        # sharded across both TensorCores on v7x / megacore.
        T = max(8, (((M + 1) // 2 + 7) // 8) * 8)
    Mp = ((M + T - 1) // T) * T
    need = per_row * T + fixed
    vmem_limit = int(min(budget, max(32 << 20, int(need * 1.4))))
    return T, Mp, vmem_limit, bf16_affine


@partial(jax.jit, static_argnames=("eps",))
def transition_down(x_nchw, gamma, beta, running_mean, running_var, conv_w, *, eps=1e-5):
    N, C, H, W = x_nchw.shape
    assert H % 2 == 0 and W % 2 == 0
    Ho, Wo = H // 2, W // 2
    M = N * Ho * Wo
    Cp = ((C + 127) // 128) * 128                 # lane-dense output / weight columns
    T, Mp, vmem_limit, bf16_affine = _plan(M, C, Cp)
    grid_m = Mp // T
    affine_dtype = jnp.bfloat16 if bf16_affine else jnp.float32

    # Fused eval-mode BatchNorm: y = x * scale + shift  (f32 fold, cast to compute dtype).
    scale = (gamma / jnp.sqrt(running_var + eps)).astype(jnp.float32)
    shift = (beta - running_mean * scale).astype(jnp.float32)
    scale2d = scale.reshape(1, C).astype(affine_dtype)
    shift2d = shift.reshape(1, C).astype(affine_dtype)

    # 1x1 conv weight (C_out, C_in, 1, 1) -> (C_in, C_out), output dim padded to Cp, bf16.
    wT = jnp.pad(conv_w.reshape(C, C).T, ((0, 0), (0, Cp - C))).astype(jnp.bfloat16)

    # Layout glue (fused into ~one copy under jit): NCHW -> window-major (4, Mp, C) bf16.
    xb = x_nchw.astype(jnp.bfloat16)
    xh = jnp.transpose(xb, (0, 2, 3, 1))                      # (N, H, W, C)
    xw = xh.reshape(N, Ho, 2, Wo, 2, C)
    xw = jnp.transpose(xw, (2, 4, 0, 1, 3, 5)).reshape(4, M, C)
    if Mp > M:
        xw = jnp.pad(xw, ((0, 0), (0, Mp - M), (0, 0)))       # zero-pad rows only

    grid_spec = pltpu.PrefetchScalarGridSpec(
        num_scalar_prefetch=0,
        grid=(grid_m, 4),                          # rows parallel, 2x2 pool window last
        in_specs=[
            pl.BlockSpec((None, T, C), lambda i, k: (k, i, 0)),
            pl.BlockSpec((1, C), lambda i, k: (0, 0)),
            pl.BlockSpec((1, C), lambda i, k: (0, 0)),
            pl.BlockSpec((C, Cp), lambda i, k: (0, 0)),
        ],
        out_specs=pl.BlockSpec((T, Cp), lambda i, k: (i, 0)),  # resident across k
    )
    out = pl.pallas_call(
        transition_down_kernel,
        out_shape=jax.ShapeDtypeStruct((Mp, Cp), jnp.float32),
        grid_spec=grid_spec,
        compiler_params=pltpu.CompilerParams(
            dimension_semantics=("parallel", "arbitrary"),
            vmem_limit_bytes=vmem_limit),
    )(xw, scale2d, shift2d, wT)

    # Layout glue back: (Mp, Cp) -> NCHW (N, C, H/2, W/2).
    out = out[:M, :C].reshape(N, Ho, Wo, C)
    return jnp.transpose(out, (0, 3, 1, 2))


def transition_down_reference(x_nchw, gamma, beta, running_mean, running_var, conv_w, eps=1e-5):
    N, C, H, W = x_nchw.shape
    scale = gamma / jnp.sqrt(running_var + eps)
    shift = beta - running_mean * scale
    a = jnp.maximum(x_nchw * scale[None, :, None, None] + shift[None, :, None, None], 0.0)
    w2 = conv_w.reshape(C, C)                                 # (C_out, C_in)
    y = jnp.einsum("nchw,oc->nohw", a, w2)
    y = y.reshape(N, C, H // 2, 2, W // 2, 2)
    return y.max(axis=(3, 5))


if __name__ == "__main__":
    N, C, H, W = 2, 4, 16, 16
    key = jax.random.PRNGKey(0)
    kx, kg, kb, km, kv, kw = jax.random.split(key, 6)

    x = jax.random.normal(kx, (N, C, H, W), dtype=jnp.float32)

    # Deterministic, non-trivial parameters (BatchNorm2d + Conv2d(C, C, 1, bias=False)).
    gamma = 1.0 + 0.5 * jax.random.uniform(kg, (C,), dtype=jnp.float32)
    beta = 0.1 * jax.random.normal(kb, (C,), dtype=jnp.float32)
    running_mean = 0.1 * jax.random.normal(km, (C,), dtype=jnp.float32)
    running_var = 0.5 + jax.random.uniform(kv, (C,), dtype=jnp.float32)
    conv_w = jax.random.normal(kw, (C, C, 1, 1), dtype=jnp.float32) / jnp.sqrt(C)

    out = jax.block_until_ready(
        transition_down(x, gamma, beta, running_mean, running_var, conv_w))

    ref = transition_down_reference(x, gamma, beta, running_mean, running_var, conv_w)
    assert out.shape == (N, C, H // 2, W // 2), out.shape
    # bf16 activations/weights (f32 accumulation) -> ~1e-2-level relative error vs f32 ref.
    err = float(jnp.max(jnp.abs(out - ref)))
    assert jnp.allclose(out, ref, atol=1e-1, rtol=2e-2), err

    print("KERNEL_OK")
</pallas_src>

<mosaic_0001>
module attributes {stable_mosaic.version = 11 : i64} {
  func.func @transition_down_kernel(%arg0: i32, %arg1: i32, %arg2: memref<1x64x4xbf16, #tpu.memory_space<vmem>>, %arg3: memref<1x4xbf16, #tpu.memory_space<vmem>>, %arg4: memref<1x4xbf16, #tpu.memory_space<vmem>>, %arg5: memref<4x128xbf16, #tpu.memory_space<vmem>>, %arg6: memref<64x128xf32, #tpu.memory_space<vmem>>) attributes {dimension_semantics = [#tpu.dimension_semantics<parallel>, #tpu.dimension_semantics<arbitrary>], iteration_bounds = array<i64: 2, 4>, scalar_prefetch = 0 : i64, scratch_operands = 0 : i64, tpu.core_type = #tpu.core_type<tc>, window_params = [{transform_indices = @transform_0, window_bounds = array<i64: 1, 64, 4>}, {pipeline_mode = #tpu.pipeline_mode<synchronous>, transform_indices = @transform_1, window_bounds = array<i64: 1, 4>}, {pipeline_mode = #tpu.pipeline_mode<synchronous>, transform_indices = @transform_2, window_bounds = array<i64: 1, 4>}, {pipeline_mode = #tpu.pipeline_mode<synchronous>, transform_indices = @transform_3, window_bounds = array<i64: 4, 128>}, {transform_indices = @transform_4, window_bounds = array<i64: 64, 128>}]} {
    %c0 = arith.constant 0 : index
    %c0_0 = arith.constant 0 : index
    %0 = vector.load %arg3[%c0, %c0_0] : memref<1x4xbf16, #tpu.memory_space<vmem>>, vector<1x4xbf16>
    %c0_1 = arith.constant 0 : index
    %c0_2 = arith.constant 0 : index
    %c0_3 = arith.constant 0 : index
    %1 = vector.load %arg2[%c0_1, %c0_2, %c0_3] : memref<1x64x4xbf16, #tpu.memory_space<vmem>>, vector<1x64x4xbf16>
    %2 = vector.shape_cast %1 : vector<1x64x4xbf16> to vector<64x4xbf16>
    %3 = vector.broadcast %0 : vector<1x4xbf16> to vector<64x4xbf16>
    %4 = arith.mulf %2, %3 : vector<64x4xbf16>
    %c0_4 = arith.constant 0 : index
    %c0_5 = arith.constant 0 : index
    %5 = vector.load %arg4[%c0_4, %c0_5] : memref<1x4xbf16, #tpu.memory_space<vmem>>, vector<1x4xbf16>
    %6 = vector.broadcast %5 : vector<1x4xbf16> to vector<64x4xbf16>
    %7 = arith.addf %4, %6 : vector<64x4xbf16>
    %cst = arith.constant 0.000000e+00 : bf16
    %8 = vector.broadcast %cst : bf16 to vector<64x4xbf16>
    %9 = arith.maximumf %7, %8 : vector<64x4xbf16>
    %c0_6 = arith.constant 0 : index
    %c0_7 = arith.constant 0 : index
    %10 = vector.load %arg5[%c0_6, %c0_7] : memref<4x128xbf16, #tpu.memory_space<vmem>>, vector<4x128xbf16>
    %cst_8 = arith.constant dense<0.000000e+00> : vector<64x128xf32>
    %11 = tpu.matmul %9, %10, %cst_8 {dimension_numbers = #tpu.dot_dimension_numbers<[1], [0], [0], [1], [0, 0, 1, 1], [], []>} : vector<64x4xbf16>, vector<4x128xbf16>, vector<64x128xf32> -> vector<64x128xf32>
    %c0_i32 = arith.constant 0 : i32
    %12 = arith.cmpi eq, %arg1, %c0_i32 : i32
    %13 = arith.extui %12 : i1 to i32
    %c0_i32_9 = arith.constant 0 : i32
    %14 = arith.cmpi ne, %13, %c0_i32_9 : i32
    scf.if %14 {
      %c0_12 = arith.constant 0 : index
      %c0_13 = arith.constant 0 : index
      %18 = vector.load %arg6[%c0_12, %c0_13] : memref<64x128xf32, #tpu.memory_space<vmem>>, vector<64x128xf32>
      tpu.vector_store %arg6[%c0_12, %c0_13], %11 {strides = array<i32>} : memref<64x128xf32, #tpu.memory_space<vmem>>, vector<64x128xf32>,
    } else {
    }
    %c0_i32_10 = arith.constant 0 : i32
    %15 = arith.cmpi sgt, %arg1, %c0_i32_10 : i32
    %16 = arith.extui %15 : i1 to i32
    %c0_i32_11 = arith.constant 0 : i32
    %17 = arith.cmpi ne, %16, %c0_i32_11 : i32
    scf.if %17 {
      %c0_12 = arith.constant 0 : index
      %c0_13 = arith.constant 0 : index
      %18 = vector.load %arg6[%c0_12, %c0_13] : memref<64x128xf32, #tpu.memory_space<vmem>>, vector<64x128xf32>
      %19 = arith.maximumf %18, %11 : vector<64x128xf32>
      %c0_14 = arith.constant 0 : index
      %c0_15 = arith.constant 0 : index
      %20 = vector.load %arg6[%c0_14, %c0_15] : memref<64x128xf32, #tpu.memory_space<vmem>>, vector<64x128xf32>
      tpu.vector_store %arg6[%c0_14, %c0_15], %19 {strides = array<i32>} : memref<64x128xf32, #tpu.memory_space<vmem>>, vector<64x128xf32>,
    } else {
    }
    return
  }
  func.func @transform_0(%arg0: i32, %arg1: i32) -> (i32, i32, i32) {
    %c0_i32 = arith.constant 0 : i32
    %c0_i32_0 = arith.constant 0 : i32
    return %arg1, %arg0, %c0_i32 : i32, i32, i32
  }
  func.func @transform_1(%arg0: i32, %arg1: i32) -> (i32, i32) {
    %c0_i32 = arith.constant 0 : i32
    %c0_i32_0 = arith.constant 0 : i32
    %c0_i32_1 = arith.constant 0 : i32
    return %c0_i32, %c0_i32_0 : i32, i32
  }
  func.func @transform_2(%arg0: i32, %arg1: i32) -> (i32, i32) {
    %c0_i32 = arith.constant 0 : i32
    %c0_i32_0 = arith.constant 0 : i32
    %c0_i32_1 = arith.constant 0 : i32
    return %c0_i32, %c0_i32_0 : i32, i32
  }
  func.func @transform_3(%arg0: i32, %arg1: i32) -> (i32, i32) {
    %c0_i32 = arith.constant 0 : i32
    %c0_i32_0 = arith.constant 0 : i32
    %c0_i32_1 = arith.constant 0 : i32
    return %c0_i32, %c0_i32_0 : i32, i32
  }
  func.func @transform_4(%arg0: i32, %arg1: i32) -> (i32, i32) {
    %c0_i32 = arith.constant 0 : i32
    %c0_i32_0 = arith.constant 0 : i32
    return %arg0, %c0_i32 : i32, i32
  }
}

</mosaic_0001>

<llo_original>
// kernel: transition_down.1
$region0: #{transition_down.1}
  #allocation0 [shape = 'u32[]', space=smem, size = 0x4, offset = 0x4, fixed_abs, tag = 'smem constant byte address 0x4 - core index']
  #allocation1 [shape = 'u32[144,128]{1,0:T(1,128)}', space=vmem, size = 0x12000, scoped, tag = 'internal scratch']
  %s0 = inlined_call_operand.vmem [shape: bf16[4,128,4], index: 0, kind: input, shape index: {}]
  %s1 = inlined_call_operand.vmem [shape: bf16[1,4], index: 1, kind: input, shape index: {}]
  %s2 = inlined_call_operand.vmem [shape: bf16[1,4], index: 2, kind: input, shape index: {}]
  %s3 = inlined_call_operand.vmem [shape: bf16[4,128], index: 3, kind: input, shape index: {}]
  %s4 = inlined_call_operand.vmem [shape: f32[128,128], index: 4, kind: output, shape index: {}]
  %s5 = sld [smem:[#allocation0]]
  $region57: #{transition_down.1} parent=0
    _
  %s7 = ssub.s32 1, %s5
  %s8 = scalar_select 0, %s7, %s5
  loop: start=0, step=1, limit=10
  $region2: #{transition_down.1} parent=0 // loop_pre_header
    _
  $region3: #{transition_down.1} parent=0 // loop_header
    %s10 = sphi 0, %s14
    %p11 = scmp.ge.s32.totalorder %s10, 10
    %s17 = sphi 0, %s29
    %s18 = sphi 0, %s25
    %s19 = sphi 0, %s17
    %s20 = sphi 0, %s18
    %s21 = sphi 0, %s19
    %s22 = sphi 0, %s20
    %s34 = sphi 0, %s36
    %s37 = sphi 0, %s34
    %s38 = sphi 0, %s37
    %s54 = sphi 0, %s38
    %s58 = sphi 0, %s58
    %s60 = sphi 0, %s58
    %s61 = sphi 0, %s60
    %s75 = sphi 0, %s61
    %s79 = sphi 0, %s79
    %s81 = sphi 0, %s79
    %s82 = sphi 0, %s81
    %s96 = sphi 0, %s82
    %s100 = sphi 0, %s100
    %s102 = sphi 0, %s100
    %s103 = sphi 0, %s102
    %s117 = sphi 0, %s103
    %s123 = sphi 0, %s125
    %s126 = sphi 0, %s123
    %s127 = sphi 0, %s126
    %s143 = sphi 0, %s127
  $region4: #{transition_down.1} parent=0 // loop_header_branch
    %13 = sbr.rel (%p11) target = $region8
  $region5: #{transition_down.1} parent=0 // loop_body
    %s15 = ssub.s32 %s10, 1
    %s16 = ssub.s32 %s10, 2
    %s23 = sadd.s32 1, %s18
    %p24 = scmp.ge.s32.totalorder %s23, 4
    %s25 = scalar_select %p24, 0, %s23
    %s26 = sadd.s32 1, %s17
    %s27 = scalar_select %p24, %s26, %s17
    %p28 = scmp.ge.s32.totalorder %s27, 2
    %s29 = scalar_select %p28, 0, %s27
    %s30 = ssub.s32 %s18, %s25
    %s31 = ssub.s32 %s17, %s29
    %s32 = sor.u32 %s30, %s31
    %p33 = scmp.eq.s32.totalorder %s32, 0
    %s35 = sadd.s32 %s34, 1
    %s36 = scalar_select %p33, %s34, %s35
    %p39 = pneg %p33
    %p40 = scmp.eq.s32.totalorder %s10, 7
    %p41 = por %p39, %p40
    %p42 = scmp.ne.s32.totalorder %s34, %s37
    %p43 = scmp.eq.s32.totalorder %s10, 0
    %p44 = por %p42, %p43
    %p45 = scmp.ne.s32.totalorder %s34, %s37
    %p46 = scmp.eq.s32.totalorder %s15, 7
    %p47 = por %p45, %p46
    %p48 = scmp.ne.s32.totalorder %s37, %s38
    %p49 = scmp.eq.s32.totalorder %s15, 0
    %p50 = por %p48, %p49
    %p51 = scmp.ne.s32.totalorder %s37, %s38
    %p52 = scmp.eq.s32.totalorder %s16, 7
    %p53 = por %p51, %p52
    %p55 = scmp.ne.s32.totalorder %s38, %s54
    %p56 = scmp.eq.s32.totalorder %s16, 0
    %p57 = por %p55, %p56
    %s59 = sadd.s32 %s58, 1
    %p62 = scmp.eq.s32.totalorder %s10, 7
    %p63 = scmp.ne.s32.totalorder %s58, %s60
    %p64 = scmp.eq.s32.totalorder %s10, 0
    %p65 = por %p63, %p64
    %p66 = scmp.ne.s32.totalorder %s58, %s60
    %p67 = scmp.eq.s32.totalorder %s15, 7
    %p68 = por %p66, %p67
    %p69 = scmp.ne.s32.totalorder %s60, %s61
    %p70 = scmp.eq.s32.totalorder %s15, 0
    %p71 = por %p69, %p70
    %p72 = scmp.ne.s32.totalorder %s60, %s61
    %p73 = scmp.eq.s32.totalorder %s16, 7
    %p74 = por %p72, %p73
    %p76 = scmp.ne.s32.totalorder %s61, %s75
    %p77 = scmp.eq.s32.totalorder %s16, 0
    %p78 = por %p76, %p77
    %s80 = sadd.s32 %s79, 1
    %p83 = scmp.eq.s32.totalorder %s10, 7
    %p84 = scmp.ne.s32.totalorder %s79, %s81
    %p85 = scmp.eq.s32.totalorder %s10, 0
    %p86 = por %p84, %p85
    %p87 = scmp.ne.s32.totalorder %s79, %s81
    %p88 = scmp.eq.s32.totalorder %s15, 7
    %p89 = por %p87, %p88
    %p90 = scmp.ne.s32.totalorder %s81, %s82
    %p91 = scmp.eq.s32.totalorder %s15, 0
    %p92 = por %p90, %p91
    %p93 = scmp.ne.s32.totalorder %s81, %s82
    %p94 = scmp.eq.s32.totalorder %s16, 7
    %p95 = por %p93, %p94
    %p97 = scmp.ne.s32.totalorder %s82, %s96
    %p98 = scmp.eq.s32.totalorder %s16, 0
    %p99 = por %p97, %p98
    %s101 = sadd.s32 %s100, 1
    %p104 = scmp.eq.s32.totalorder %s10, 7
    %p105 = scmp.ne.s32.totalorder %s100, %s102
    %p106 = scmp.eq.s32.totalorder %s10, 0
    %p107 = por %p105, %p106
    %p108 = scmp.ne.s32.totalorder %s100, %s102
    %p109 = scmp.eq.s32.totalorder %s15, 7
    %p110 = por %p108, %p109
    %p111 = scmp.ne.s32.totalorder %s102, %s103
    %p112 = scmp.eq.s32.totalorder %s15, 0
    %p113 = por %p111, %p112
    %p114 = scmp.ne.s32.totalorder %s102, %s103
    %p115 = scmp.eq.s32.totalorder %s16, 7
    %p116 = por %p114, %p115
    %p118 = scmp.ne.s32.totalorder %s103, %s117
    %p119 = scmp.eq.s32.totalorder %s16, 0
    %p120 = por %p118, %p119
    %s121 = ssub.s32 %s17, %s29
    %p122 = scmp.eq.s32.totalorder %s121, 0
    %s124 = sadd.s32 %s123, 1
    %s125 = scalar_select %p122, %s123, %s124
    %p128 = pneg %p122
    %p129 = scmp.eq.s32.totalorder %s10, 7
    %p130 = por %p128, %p129
    %p131 = scmp.ne.s32.totalorder %s123, %s126
    %p132 = scmp.eq.s32.totalorder %s10, 0
    %p133 = por %p131, %p132
    %p134 = scmp.ne.s32.totalorder %s123, %s126
    %p135 = scmp.eq.s32.totalorder %s15, 7
    %p136 = por %p134, %p135
    %p137 = scmp.ne.s32.totalorder %s126, %s127
    %p138 = scmp.eq.s32.totalorder %s15, 0
    %p139 = por %p137, %p138
    %p140 = scmp.ne.s32.totalorder %s126, %s127
    %p141 = scmp.eq.s32.totalorder %s16, 7
    %p142 = por %p140, %p141
    %p144 = scmp.ne.s32.totalorder %s127, %s143
    %p145 = scmp.eq.s32.totalorder %s16, 0
    %p146 = por %p144, %p145
    %p147 = scmp.le.s32.totalorder 1, %s10
    %p148 = scmp.lt.s32.totalorder %s10, 9
    %p149 = pnand %p147, %p148
    %p150 = pneg %p149
    // Predicated region
    $region9: #{transition_down.1} parent=5 // pred_check
      _
    $region10: #{transition_down.1} parent=5 // pred_check_branch
      %152 = sbr.rel (%p149) target = $region12
    $region11: #{transition_down.1} parent=5 // pred_region
      %s153 = ssub.s32 %s10, 1
      // Predicated region
      $region13: #{transition_down.1} parent=11 // pred_check
        %p154 = pneg %p71
      $region14: #{transition_down.1} parent=11 // pred_check_branch
        %156 = sbr.rel (%p154) target = $region16
      $region15: #{transition_down.1} parent=11 // pred_region
        _
      $region16: #{transition_down.1} parent=11 // pred_fallthru
        _
      // Predicated region
      $region17: #{transition_down.1} parent=11 // pred_check
        %p157 = pneg %p92
      $region18: #{transition_down.1} parent=11 // pred_check_branch
        %159 = sbr.rel (%p157) target = $region20
      $region19: #{transition_down.1} parent=11 // pred_region
        _
      $region20: #{transition_down.1} parent=11 // pred_fallthru
        _
      // Predicated region
      $region21: #{transition_down.1} parent=11 // pred_check
        %p160 = pneg %p113
      $region22: #{transition_down.1} parent=11 // pred_check_branch
        %162 = sbr.rel (%p160) target = $region24
      $region23: #{transition_down.1} parent=11 // pred_region
        _
      $region24: #{transition_down.1} parent=11 // pred_fallthru
        _
    $region12: #{transition_down.1} parent=5 // pred_fallthru
      _
    %p163 = scmp.lt.s32.totalorder %s10, 8
    // Predicated region
    $region25: #{transition_down.1} parent=5 // pred_check
      %p164 = pneg %p163
    $region26: #{transition_down.1} parent=5 // pred_check_branch
      %166 = sbr.rel (%p164) target = $region28
    $region27: #{transition_down.1} parent=5 // pred_region
      // Predicated region
      $region29: #{transition_down.1} parent=27 // pred_check
        %p167 = pneg %p44
      $region30: #{transition_down.1} parent=27 // pred_check_branch
        %169 = sbr.rel (%p167) target = $region32
      $region31: #{transition_down.1} parent=27 // pred_region
        %s170 = smul.u32 8, %s17
        %p171 = scmp.lt.s32.totalorder %s18, 3
        %s172 = scalar_select %p171, %s18, 3
        %p173 = scmp.lt.s32.totalorder %s170, 15
        %s174 = scalar_select %p173, %s170, 15
        %s175 = smul.addr %s172, 16
        %s176 = sadd.s32 %s174, %s175
        %s177 = smul.addr %s176, 4
        %s178 = scalar_lea.vmem %s0, %s177
        %s179 = smul.u32 8, %s17
      $region32: #{transition_down.1} parent=27 // pred_fallthru
        _
    $region28: #{transition_down.1} parent=5 // pred_fallthru
      _
    %p180 = scmp.le.s32.totalorder 1, %s10
    %p181 = scmp.lt.s32.totalorder %s10, 9
    %p182 = pnand %p180, %p181
    %p183 = pneg %p182
    // Predicated region
    $region33: #{transition_down.1} parent=5 // pred_check
      _
    $region34: #{transition_down.1} parent=5 // pred_check_branch
      %185 = sbr.rel (%p182) target = $region36
    $region35: #{transition_down.1} parent=5 // pred_region
      %s186 = ssub.s32 %s10, 1
      %s187 = smul.u32 8, %s19
      %p188 = scmp.lt.s32.totalorder %s20, 3
      %s189 = scalar_select %p188, %s20, 3
      %p190 = scmp.lt.s32.totalorder %s187, 15
      %s191 = scalar_select %p190, %s187, 15
      %s192 = smul.addr %s189, 16
      %s193 = sadd.s32 %s191, %s192
      %s194 = smul.addr %s193, 4
      %s195 = scalar_lea.vmem %s0, %s194
      %p196 = pneg %p50
      %p197 = pneg %p47
      %p198 = pneg %p71
      %p199 = pneg %p68
      %p200 = pneg %p92
      %p201 = pneg %p89
      %p202 = pneg %p113
      %p203 = pneg %p110
      %p204 = pneg %p139
      %p205 = pneg %p136
      %s206 = smul.u32 8, %s19
      %p207 = scmp.lt.s32.totalorder %s206, 15
      %s208 = scalar_select %p207, %s206, 15
      %s209 = smul.addr %s208, 8
      %s210 = scalar_lea.vmem %s4, %s209
      %s211 = smul.u32 8, %s19
      %p212 = scmp.lt.s32.totalorder %s20, 3
      %s213 = scalar_select %p212, %s20, 3
      %p214 = scmp.lt.s32.totalorder %s211, 15
      %s215 = scalar_select %p214, %s211, 15
      %s216 = smul.addr %s213, 16
      %s217 = sadd.s32 %s215, %s216
      %s218 = smul.addr %s217, 4
      %s219 = scalar_lea.vmem %s0, %s218
      %s220 = smul.u32 8, %s19
      %s221 = smul.u32 8, %s19
      %p222 = scmp.lt.s32.totalorder %s221, 15
      %s223 = scalar_select %p222, %s221, 15
      %s224 = smul.addr %s223, 8
      %s225 = scalar_lea.vmem %s4, %s224
      %s226 = smul.u32 8, %s19
      %v228 = vld [vmem:[%s1] sm:$0x1]
      %v229 = vld [vmem:[%s219] sm:$0xf]
      %v230 = vld [vmem:[%s219 + $0x4] sm:$0xf]
      %v231 = vld [vmem:[%s219 + $0x8] sm:$0xf]
      %v232 = vld [vmem:[%s219 + $0xc] sm:$0xf]
      %v233 = vld [vmem:[%s219 + $0x10] sm:$0xf]
      %v234 = vld [vmem:[%s219 + $0x14] sm:$0xf]
      %v235 = vld [vmem:[%s219 + $0x18] sm:$0xf]
      %v236 = vld [vmem:[%s219 + $0x1c] sm:$0xf]
      %v238 = vpack.i.b16 %v228, %v228
      %v240 = vlaneseq
      %v241 = vshrl.u32 %v240, 7
      %v242 = vsub.s32 0, %v241
      %v243 = vrot.slane %v238, %v242
      %v245 = vunpack.c.l.b16 %v243
      %v246 = vpack.c.b16 %v245, %v245
      %v248 = vmul.bf16 %v229, %v246
      %v249 = vmul.bf16 %v230, %v246
      %v250 = vmul.bf16 %v231, %v246
      %v251 = vmul.bf16 %v232, %v246
      %v252 = vmul.bf16 %v233, %v246
      %v253 = vmul.bf16 %v234, %v246
      %v254 = vmul.bf16 %v235, %v246
      %v255 = vmul.bf16 %v236, %v246
      %v256 = vld [vmem:[%s2] sm:$0x1]
      %v258 = vpack.i.b16 %v256, %v256
      %v260 = vlaneseq
      %v261 = vshrl.u32 %v260, 7
      %v262 = vsub.s32 0, %v261
      %v263 = vrot.slane %v258, %v262
      %v265 = vunpack.c.l.b16 %v263
      %v266 = vpack.c.b16 %v265, %v265
      %v268 = vadd.bf16 %v248, %v266
      %v269 = vadd.bf16 %v249, %v266
      %v270 = vadd.bf16 %v250, %v266
      %v271 = vadd.bf16 %v251, %v266
      %v272 = vadd.bf16 %v252, %v266
      %v273 = vadd.bf16 %v253, %v266
      %v274 = vadd.bf16 %v254, %v266
      %v275 = vadd.bf16 %v255, %v266
      %v276 = vmax.bf16 %v268, 0
      %v277 = vmax.bf16 %v269, 0
      %v278 = vmax.bf16 %v270, 0
      %v279 = vmax.bf16 %v271, 0
      %v280 = vmax.bf16 %v272, 0
      %v281 = vmax.bf16 %v273, 0
      %v282 = vmax.bf16 %v274, 0
      %v283 = vmax.bf16 %v275, 0
      %v284 = vld [vmem:[%s3] sm:$0x3]
      %v293 = vunpack.c.l.b16 %v276
      %v294 = vunpack.c.l.b16 %v277
      %v295 = vunpack.c.l.b16 %v278
      %v296 = vunpack.c.l.b16 %v279
      %v297 = vunpack.c.l.b16 %v280
      %v298 = vunpack.c.l.b16 %v281
      %v299 = vunpack.c.l.b16 %v282
      %v300 = vunpack.c.l.b16 %v283
      %v301 = vpack.c.b16 %v294, %v293
      %v302 = vpack.c.b16 %v296, %v295
      %v303 = vpack.c.b16 %v298, %v297
      %v304 = vpack.c.b16 %v300, %v299
      %vm305 = vcmask 31744
      %v307 = vsel %vm305, %v301, 0
      %v310 = vsel %vm305, %v302, 0
      %v313 = vsel %vm305, %v303, 0
      %v316 = vsel %vm305, %v304, 0
      %vm318 = vcmask 1041408
      %v320 = vsel %vm318, %v284, 0
      %322 = vmatprep.subr.bf16.mxu0 0
      %323 = vmatpush1.bf16.msra.mxu0 %v320
      %324 = vmatprep.subr.bf16.mxu0 0
      %325 = vmatpush1.bf16.msra.mxu0 0
      %326 = vmatprep.subr.bf16.mxu0 0
      %327 = vmatpush1.bf16.msra.mxu0 0
      %328 = vmatprep.subr.bf16.mxu0 0
      %329 = vmatpush1.bf16.msra.mxu0 0
      %330 = vmatprep.subr.bf16.mxu0 0
      %331 = vmatpush1.bf16.msra.mxu0 0
      %332 = vmatprep.subr.bf16.mxu0 0
      %333 = vmatpush1.bf16.msra.mxu0 0
      %334 = vmatprep.subr.bf16.mxu0 0
      %335 = vmatpush1.bf16.msra.mxu0 0
      %336 = vmatprep.subr.bf16.mxu0 0
      %337 = vmatpush1.bf16.msra.mxu0 0
      %338 = vmatprep.subr.bf16.mxu0 0
      %339 = vmatpush1.bf16.msra.mxu0 0
      %340 = vmatprep.subr.bf16.mxu0 0
      %341 = vmatpush1.bf16.msra.mxu0 0
      %342 = vmatprep.subr.bf16.mxu0 0
      %343 = vmatpush1.bf16.msra.mxu0 0
      %344 = vmatprep.subr.bf16.mxu0 0
      %345 = vmatpush1.bf16.msra.mxu0 0
      %346 = vmatprep.subr.bf16.mxu0 0
      %347 = vmatpush1.bf16.msra.mxu0 0
      %348 = vmatprep.subr.bf16.mxu0 0
      %349 = vmatpush1.bf16.msra.mxu0 0
      %350 = vmatprep.subr.bf16.mxu0 0
      %351 = vmatpush1.bf16.msra.mxu0 0
      %352 = vmatprep.subr.bf16.mxu0 0
      %353 = vmatpush1.bf16.msra.mxu0 0
      %354 = vmatprep.mubr.bf16.mxu0 0
      %355 = vmatmul.mubr.bf16.gmra.mrb[0].mxu0 %v307
      %v356 = vpop.f32.mrb[0].mxu0
      %v357 = vadd.f32 0.0, %v356
      %v358 = vpop.f32.mrb[0].mxu0
      %v359 = vpop.f32.mrb[0].mxu0
      %v360 = vadd.f32 0.0, %v359
      %v361 = vpop.f32.mrb[0].mxu0
      %362 = vmatprep.mubr.bf16.mxu0 0
      %363 = vmatmul.mubr.bf16.gmra.mrb[0].mxu0 %v310
      %v364 = vpop.f32.mrb[0].mxu0
      %v365 = vadd.f32 0.0, %v364
      %v366 = vpop.f32.mrb[0].mxu0
      %v367 = vpop.f32.mrb[0].mxu0
      %v368 = vadd.f32 0.0, %v367
      %v369 = vpop.f32.mrb[0].mxu0
      %370 = vmatprep.mubr.bf16.mxu0 0
      %371 = vmatmul.mubr.bf16.gmra.mrb[0].mxu0 %v313
      %v372 = vpop.f32.mrb[0].mxu0
      %v373 = vadd.f32 0.0, %v372
      %v374 = vpop.f32.mrb[0].mxu0
      %v375 = vpop.f32.mrb[0].mxu0
      %v376 = vadd.f32 0.0, %v375
      %v377 = vpop.f32.mrb[0].mxu0
      %378 = vmatprep.mubr.bf16.mxu0 0
      %379 = vmatmul.mubr.bf16.gmra.mrb[0].mxu0 %v316
      %v380 = vpop.f32.mrb[0].mxu0
      %v381 = vadd.f32 0.0, %v380
      %v382 = vpop.f32.mrb[0].mxu0
      %v383 = vpop.f32.mrb[0].mxu0
      %v384 = vadd.f32 0.0, %v383
      %v385 = vpop.f32.mrb[0].mxu0
      %386 = vdwg.mxu0
      %p387 = scmp.eq.s32.totalorder %s20, 0
      // Predicated region
      $region37: #{transition_down.1} parent=35 // pred_check
        %p388 = pneg %p387
      $region38: #{transition_down.1} parent=35 // pred_check_branch
        %390 = sbr.rel (%p388) target = $region40
      $region39: #{transition_down.1} parent=35 // pred_region
        %391 = vst [vmem:[%s225] sm:$0xff] %v357
        %392 = vst [vmem:[%s225 + $0x8] sm:$0xff] %v360
        %393 = vst [vmem:[%s225 + $0x10] sm:$0xff] %v365
        %394 = vst [vmem:[%s225 + $0x18] sm:$0xff] %v368
        %395 = vst [vmem:[%s225 + $0x20] sm:$0xff] %v373
        %396 = vst [vmem:[%s225 + $0x28] sm:$0xff] %v376
        %397 = vst [vmem:[%s225 + $0x30] sm:$0xff] %v381
        %398 = vst [vmem:[%s225 + $0x38] sm:$0xff] %v384
      $region40: #{transition_down.1} parent=35 // pred_fallthru
        _
      %p399 = scmp.gt.s32.totalorder %s20, 0
      // Predicated region
      $region41: #{transition_down.1} parent=35 // pred_check
        %p400 = pneg %p399
      $region42: #{transition_down.1} parent=35 // pred_check_branch
        %402 = sbr.rel (%p400) target = $region44
      $region43: #{transition_down.1} parent=35 // pred_region
        %v403 = vld [vmem:[%s225] sm:$0xff]
        %v404 = vld [vmem:[%s225 + $0x8] sm:$0xff]
        %v405 = vld [vmem:[%s225 + $0x10] sm:$0xff]
        %v406 = vld [vmem:[%s225 + $0x18] sm:$0xff]
        %v407 = vld [vmem:[%s225 + $0x20] sm:$0xff]
        %v408 = vld [vmem:[%s225 + $0x28] sm:$0xff]
        %v409 = vld [vmem:[%s225 + $0x30] sm:$0xff]
        %v410 = vld [vmem:[%s225 + $0x38] sm:$0xff]
        %v411 = vmax.f32 %v403, %v357
        %v412 = vmax.f32 %v404, %v360
        %v413 = vmax.f32 %v405, %v365
        %v414 = vmax.f32 %v406, %v368
        %v415 = vmax.f32 %v407, %v373
        %v416 = vmax.f32 %v408, %v376
        %v417 = vmax.f32 %v409, %v381
        %v418 = vmax.f32 %v410, %v384
        %419 = vst [vmem:[%s225] sm:$0xff] %v411
        %420 = vst [vmem:[%s225 + $0x8] sm:$0xff] %v412
        %421 = vst [vmem:[%s225 + $0x10] sm:$0xff] %v413
        %422 = vst [vmem:[%s225 + $0x18] sm:$0xff] %v414
        %423 = vst [vmem:[%s225 + $0x20] sm:$0xff] %v415
        %424 = vst [vmem:[%s225 + $0x28] sm:$0xff] %v416
        %425 = vst [vmem:[%s225 + $0x30] sm:$0xff] %v417
        %426 = vst [vmem:[%s225 + $0x38] sm:$0xff] %v418
      $region44: #{transition_down.1} parent=35 // pred_fallthru
        _
      %s427 = smul.u32 8, %s19
      %p428 = scmp.lt.s32.totalorder %s427, 15
      %s429 = scalar_select %p428, %s427, 15
      %s430 = smul.addr %s429, 8
      %s431 = scalar_lea.vmem %s4, %s430
      // Predicated region
      $region45: #{transition_down.1} parent=35 // pred_check
        %p432 = pneg %p136
      $region46: #{transition_down.1} parent=35 // pred_check_branch
        %434 = sbr.rel (%p432) target = $region48
      $region47: #{transition_down.1} parent=35 // pred_region
        %s435 = smul.u32 8, %s19
      $region48: #{transition_down.1} parent=35 // pred_fallthru
        _
    $region36: #{transition_down.1} parent=5 // pred_fallthru
      _
    %p436 = scmp.le.s32.totalorder 2, %s10
    // Predicated region
    $region49: #{transition_down.1} parent=5 // pred_check
      %p437 = pneg %p436
    $region50: #{transition_down.1} parent=5 // pred_check_branch
      %439 = sbr.rel (%p437) target = $region52
    $region51: #{transition_down.1} parent=5 // pred_region
      %s440 = ssub.s32 %s10, 2
      // Predicated region
      $region53: #{transition_down.1} parent=51 // pred_check
        %p441 = pneg %p142
      $region54: #{transition_down.1} parent=51 // pred_check_branch
        %443 = sbr.rel (%p441) target = $region56
      $region55: #{transition_down.1} parent=51 // pred_region
        %s444 = smul.u32 8, %s21
        %p445 = scmp.lt.s32.totalorder %s444, 15
        %s446 = scalar_select %p445, %s444, 15
        %s447 = smul.addr %s446, 8
        %s448 = scalar_lea.vmem %s4, %s447
      $region56: #{transition_down.1} parent=51 // pred_fallthru
        _
    $region52: #{transition_down.1} parent=5 // pred_fallthru
      _
  $region6: #{transition_down.1} parent=0 // loop_footer
    %s14 = sadd.s32 1, %s10
  $region7: #{transition_down.1} parent=0 // loop_footer_branch
    %9 = sbr.rel target = $region3
  $region8: #{transition_down.1} parent=0 // loop_exit
    _

</llo_original>
